<compile_context>
chip_gen: v7x
topology: tpu7x:2x2x1
jax: 0.10.0
libtpu: 0.0.40
codegen_flags: <defaults>
</compile_context>

<pallas_src>
import functools

import jax
import jax.numpy as jnp
from jax import lax
from jax.experimental import pallas as pl
from jax.experimental.pallas import tpu as pltpu

BN_EPS = 1e-5
LANE = 128


def _round_up(n, m):
    return ((n + m - 1) // m) * m


def _dnn_layer_kernel(x_ref, w_ref, g_ref, b_ref, o_ref, acc_ref, *,
                      b_real: int, out_dim: int):
    """One grid step == one (Linear -> BN -> ReLU[not last]) block; last step also
    computes the masked log_softmax and writes the output block."""
    li = pl.program_id(0)
    is_last = li == pl.num_programs(0) - 1

    # Load the (padded) input activation into the persistent scratch on the first step.
    @pl.when(li == 0)
    def _():
        acc_ref[...] = x_ref[...].astype(jnp.float32)

    y = acc_ref[...]                                        # (Bp, Dp) f32
    w = w_ref[0]                                            # (Dp, Dp) bf16, pre-transposed
    z = jnp.dot(y.astype(jnp.bfloat16), w,
                preferred_element_type=jnp.float32)         # MXU, f32 accumulate

    bp = z.shape[0]
    padded_rows = bp != b_real
    inv_b = jnp.float32(1.0 / b_real)
    if padded_rows:
        row = lax.broadcasted_iota(jnp.int32, z.shape, 0)
        row_valid = row < b_real

    # Two-pass train-mode BatchNorm (biased variance, eps=1e-5), folded to FMA.
    # Padded batch rows are exactly zero on entry to the matmul, so they contribute
    # nothing to the sums; the real-row count b_real is used for the averages.
    mean = jnp.sum(z, axis=0, keepdims=True) * inv_b
    centered = z - mean
    c_var = jnp.where(row_valid, centered, 0.0) if padded_rows else centered
    var = jnp.sum(c_var * c_var, axis=0, keepdims=True) * inv_b
    scale = g_ref[0] * lax.rsqrt(var + BN_EPS)              # rsqrt -> EUP slot
    z = centered * scale + b_ref[0]                         # (Bp, Dp)

    # Carry the ReLU'd, row-masked activation to the next layer.  (On the final step
    # this store is unused but harmless; the un-ReLU'd `z` is used below.)
    z_act = jnp.maximum(z, 0.0)
    if padded_rows:
        z_act = jnp.where(row_valid, z_act, 0.0)            # keep padded rows neutral
    acc_ref[...] = z_act

    @pl.when(is_last)
    def _():
        # log_softmax over the real (unpadded) output columns only.
        col = lax.broadcasted_iota(jnp.int32, z.shape, 1)
        valid = col < out_dim
        masked = jnp.where(valid, z, -jnp.inf)
        m = jnp.max(masked, axis=1, keepdims=True)
        sh = masked - m
        lse = jnp.log(jnp.sum(jnp.exp(sh), axis=1, keepdims=True))
        o_ref[...] = jnp.where(valid, sh - lse, 0.0).astype(o_ref.dtype)


def prepare_params(params, d_in):
    """One-time weight preparation (hoisted out of the per-call path).

    params: list of (W (Cout, Cin), gamma (Cout,), beta (Cout,)).
    Returns stacked, pre-transposed, lane-padded arrays plus the real output dim.
    """
    dims = [d_in] + [w.shape[0] for (w, _, _) in params]
    dp = _round_up(max(dims), LANE)
    n_layers = len(params)
    w_stack = jnp.zeros((n_layers, dp, dp), jnp.bfloat16)
    g_stack = jnp.ones((n_layers, 1, dp), jnp.float32)
    b_stack = jnp.zeros((n_layers, 1, dp), jnp.float32)
    for li, (w, g, b) in enumerate(params):
        cout, cin = w.shape
        w_stack = w_stack.at[li, :cin, :cout].set(w.T.astype(jnp.bfloat16))
        g_stack = g_stack.at[li, 0, :cout].set(g.reshape(-1).astype(jnp.float32))
        b_stack = b_stack.at[li, 0, :cout].set(b.reshape(-1).astype(jnp.float32))
    return w_stack, g_stack, b_stack, dims[-1]


@functools.partial(jax.jit, static_argnames=("d_out",))
def dnn_forward(x, w_stack, g_stack, b_stack, *, d_out):
    """x: (B, d_in) f32. Stacked prepared params from prepare_params()."""
    B, d_in = x.shape
    n_layers, dp, _ = w_stack.shape
    bp = max(_round_up(B, 16), 16)                          # bf16 sublane packing

    # Zero-pad input rows/cols (zeros are exactly neutral for matmul / BN sums).
    x_pad = jnp.zeros((bp, dp), jnp.float32).at[:B, :d_in].set(x.astype(jnp.float32))

    # Explicit scoped-VMEM budget: double-buffered weight tile + gamma/beta tiles,
    # input/output blocks, activation scratch, plus 2x headroom.
    vmem_estimate = (2 * dp * dp * 2          # weight tile, double-buffered, bf16
                     + 2 * 2 * dp * 4         # gamma/beta tiles, double-buffered
                     + 2 * bp * dp * 4        # x block
                     + 2 * bp * dp * 4        # output block
                     + bp * dp * 4)           # activation scratch
    vmem_limit = int(min(64 * 1024 * 1024,
                         max(16 * 1024 * 1024, 2 * vmem_estimate)))

    kernel = functools.partial(_dnn_layer_kernel, b_real=B, out_dim=d_out)

    out_pad = pl.pallas_call(
        kernel,
        out_shape=jax.ShapeDtypeStruct((bp, dp), jnp.float32),
        grid=(n_layers,),
        in_specs=[
            # x: constant block index -> fetched once, stays resident.
            pl.BlockSpec((bp, dp), lambda l: (0, 0)),
            # Weights / BN params: pipelined over the layer grid (DMA of layer l+1
            # overlaps the matmul of layer l).
            pl.BlockSpec((1, dp, dp), lambda l: (l, 0, 0)),
            pl.BlockSpec((1, 1, dp), lambda l: (l, 0, 0)),
            pl.BlockSpec((1, 1, dp), lambda l: (l, 0, 0)),
        ],
        out_specs=pl.BlockSpec((bp, dp), lambda l: (0, 0)),
        scratch_shapes=[pltpu.VMEM((bp, dp), jnp.float32)],
        compiler_params=pltpu.CompilerParams(
            dimension_semantics=("arbitrary",),
            vmem_limit_bytes=vmem_limit),
    )(x_pad, w_stack, g_stack, b_stack)
    return out_pad[:B, :d_out]


def init_params(layers, std=0.01, seed=0):
    """Deterministic 'gauss'-style init for Linear weights; BN gamma=1, beta=0."""
    key = jax.random.PRNGKey(seed)
    params = []
    for i in range(len(layers) - 1):
        key, sub = jax.random.split(key)
        w = std * jax.random.normal(sub, (layers[i + 1], layers[i]), dtype=jnp.float32)
        gamma = jnp.ones((layers[i + 1],), jnp.float32)
        beta = jnp.zeros((layers[i + 1],), jnp.float32)
        params.append((w, gamma, beta))
    return params


def dnn_reference(x, params):
    """Pure-JAX reference with the same bf16-matmul / f32 two-pass-BN numerics."""
    y = x.astype(jnp.float32)
    n = len(params)
    for i, (w, g, b) in enumerate(params):
        z = jnp.dot(y.astype(jnp.bfloat16), w.T.astype(jnp.bfloat16),
                    preferred_element_type=jnp.float32)
        mean = jnp.mean(z, axis=0, keepdims=True)
        var = jnp.mean((z - mean) ** 2, axis=0, keepdims=True)
        z = (z - mean) * lax.rsqrt(var + BN_EPS)
        z = z * g[None, :] + b[None, :]
        if i < n - 1:
            z = jnp.maximum(z, 0.0)
        y = z
    return jax.nn.log_softmax(y, axis=1)


if __name__ == "__main__":
    # Small shapes consistent with the module: layers=[in, hidden, out]
    layers = [32, 64, 16]
    batch = 8

    key = jax.random.PRNGKey(0)
    x = jax.random.normal(key, (batch, layers[0]), dtype=jnp.float32)
    params = init_params(layers, std=0.01, seed=0)

    # One-time weight preparation, then a jitted forward call.
    w_stack, g_stack, b_stack, d_out = prepare_params(params, layers[0])
    out = jax.block_until_ready(
        dnn_forward(x, w_stack, g_stack, b_stack, d_out=d_out))

    assert out.shape == (batch, layers[-1])
    # log_softmax rows should sum to ~1 after exp
    row_sums = jnp.exp(out).sum(axis=1)
    assert bool(jnp.all(jnp.abs(row_sums - 1.0) < 1e-4))
    # matches pure-JAX reference with identical matmul / BN numerics
    ref = dnn_reference(x, params)
    assert bool(jnp.max(jnp.abs(out - ref)) < 5e-3)

    print("KERNEL_OK")
</pallas_src>

<mosaic_0001>
module attributes {stable_mosaic.version = 11 : i64} {
  func.func @_dnn_layer_kernel(%arg0: i32, %arg1: memref<16x128xf32, #tpu.memory_space<vmem>>, %arg2: memref<1x128x128xbf16, #tpu.memory_space<vmem>>, %arg3: memref<1x1x128xf32, #tpu.memory_space<vmem>>, %arg4: memref<1x1x128xf32, #tpu.memory_space<vmem>>, %arg5: memref<16x128xf32, #tpu.memory_space<vmem>>, %arg6: memref<16x128xf32, #tpu.memory_space<vmem>>) attributes {dimension_semantics = [#tpu.dimension_semantics<arbitrary>], iteration_bounds = array<i64: 2>, scalar_prefetch = 0 : i64, scratch_operands = 1 : i64, tpu.core_type = #tpu.core_type<tc>, window_params = [{pipeline_mode = #tpu.pipeline_mode<synchronous>, transform_indices = @transform_0, window_bounds = array<i64: 16, 128>}, {transform_indices = @transform_1, window_bounds = array<i64: 1, 128, 128>}, {transform_indices = @transform_2, window_bounds = array<i64: 1, 1, 128>}, {transform_indices = @transform_3, window_bounds = array<i64: 1, 1, 128>}, {pipeline_mode = #tpu.pipeline_mode<synchronous>, transform_indices = @transform_4, window_bounds = array<i64: 16, 128>}]} {
    %c1_i32 = arith.constant 1 : i32
    %0 = arith.cmpi eq, %arg0, %c1_i32 : i32
    %c0_i32 = arith.constant 0 : i32
    %1 = arith.cmpi eq, %arg0, %c0_i32 : i32
    %2 = arith.extui %1 : i1 to i32
    %c0_i32_0 = arith.constant 0 : i32
    %3 = arith.cmpi ne, %2, %c0_i32_0 : i32
    scf.if %3 {
      %c0_22 = arith.constant 0 : index
      %c0_23 = arith.constant 0 : index
      %44 = vector.load %arg1[%c0_22, %c0_23] : memref<16x128xf32, #tpu.memory_space<vmem>>, vector<16x128xf32>
      %c0_24 = arith.constant 0 : index
      %c0_25 = arith.constant 0 : index
      %45 = vector.load %arg6[%c0_24, %c0_25] : memref<16x128xf32, #tpu.memory_space<vmem>>, vector<16x128xf32>
      tpu.vector_store %arg6[%c0_24, %c0_25], %44 {strides = array<i32>} : memref<16x128xf32, #tpu.memory_space<vmem>>, vector<16x128xf32>,
    } else {
    }
    %c0 = arith.constant 0 : index
    %c0_1 = arith.constant 0 : index
    %4 = vector.load %arg6[%c0, %c0_1] : memref<16x128xf32, #tpu.memory_space<vmem>>, vector<16x128xf32>
    %c0_2 = arith.constant 0 : index
    %c0_3 = arith.constant 0 : index
    %c0_4 = arith.constant 0 : index
    %5 = vector.load %arg2[%c0_2, %c0_3, %c0_4] : memref<1x128x128xbf16, #tpu.memory_space<vmem>>, vector<1x128x128xbf16>
    %6 = vector.shape_cast %5 : vector<1x128x128xbf16> to vector<128x128xbf16>
    %7 = arith.truncf %4 : vector<16x128xf32> to vector<16x128xbf16>
    %cst = arith.constant dense<0.000000e+00> : vector<16x128xf32>
    %8 = tpu.matmul %7, %6, %cst {dimension_numbers = #tpu.dot_dimension_numbers<[1], [0], [0], [1], [0, 0, 1, 1], [], []>} : vector<16x128xbf16>, vector<128x128xbf16>, vector<16x128xf32> -> vector<16x128xf32>
    %9 = tpu.iota {dimensions = array<i32: 0>} : vector<16x128xi32>
    %c8_i32 = arith.constant 8 : i32
    %10 = vector.broadcast %c8_i32 : i32 to vector<16x128xi32>
    %11 = arith.cmpi slt, %9, %10 : vector<16x128xi32>
    %cst_5 = arith.constant dense<0.000000e+00> : vector<128xf32>
    %12 = vector.multi_reduction <add>, %8, %cst_5 [0] : vector<16x128xf32> to vector<128xf32>
    %13 = vector.shape_cast %12 : vector<128xf32> to vector<1x128xf32>
    %cst_6 = arith.constant 1.250000e-01 : f32
    %14 = vector.broadcast %cst_6 : f32 to vector<1x128xf32>
    %15 = arith.mulf %13, %14 : vector<1x128xf32>
    %16 = vector.broadcast %15 : vector<1x128xf32> to vector<16x128xf32>
    %17 = arith.subf %8, %16 : vector<16x128xf32>
    %cst_7 = arith.constant 0.000000e+00 : f32
    %18 = vector.broadcast %cst_7 : f32 to vector<16x128xf32>
    %19 = arith.select %11, %17, %18 : vector<16x128xi1>, vector<16x128xf32>
    %20 = arith.mulf %19, %19 : vector<16x128xf32>
    %cst_8 = arith.constant dense<0.000000e+00> : vector<128xf32>
    %21 = vector.multi_reduction <add>, %20, %cst_8 [0] : vector<16x128xf32> to vector<128xf32>
    %22 = vector.shape_cast %21 : vector<128xf32> to vector<1x128xf32>
    %cst_9 = arith.constant 1.250000e-01 : f32
    %23 = vector.broadcast %cst_9 : f32 to vector<1x128xf32>
    %24 = arith.mulf %22, %23 : vector<1x128xf32>
    %c0_10 = arith.constant 0 : index
    %c0_11 = arith.constant 0 : index
    %c0_12 = arith.constant 0 : index
    %25 = vector.load %arg3[%c0_10, %c0_11, %c0_12] : memref<1x1x128xf32, #tpu.memory_space<vmem>>, vector<1x1x128xf32>
    %26 = vector.shape_cast %25 : vector<1x1x128xf32> to vector<1x128xf32>
    %cst_13 = arith.constant 9.99999974E-6 : f32
    %27 = vector.broadcast %cst_13 : f32 to vector<1x128xf32>
    %28 = arith.addf %24, %27 : vector<1x128xf32>
    %29 = math.rsqrt %28 : vector<1x128xf32>
    %30 = arith.mulf %26, %29 : vector<1x128xf32>
    %31 = vector.broadcast %30 : vector<1x128xf32> to vector<16x128xf32>
    %32 = arith.mulf %17, %31 : vector<16x128xf32>
    %c0_14 = arith.constant 0 : index
    %c0_15 = arith.constant 0 : index
    %c0_16 = arith.constant 0 : index
    %33 = vector.load %arg4[%c0_14, %c0_15, %c0_16] : memref<1x1x128xf32, #tpu.memory_space<vmem>>, vector<1x1x128xf32>
    %34 = vector.shape_cast %33 : vector<1x1x128xf32> to vector<1x128xf32>
    %35 = vector.broadcast %34 : vector<1x128xf32> to vector<16x128xf32>
    %36 = arith.addf %32, %35 : vector<16x128xf32>
    %cst_17 = arith.constant 0.000000e+00 : f32
    %37 = vector.broadcast %cst_17 : f32 to vector<16x128xf32>
    %38 = arith.maximumf %36, %37 : vector<16x128xf32>
    %cst_18 = arith.constant 0.000000e+00 : f32
    %39 = vector.broadcast %cst_18 : f32 to vector<16x128xf32>
    %40 = arith.select %11, %38, %39 : vector<16x128xi1>, vector<16x128xf32>
    %c0_19 = arith.constant 0 : index
    %c0_20 = arith.constant 0 : index
    %41 = vector.load %arg6[%c0_19, %c0_20] : memref<16x128xf32, #tpu.memory_space<vmem>>, vector<16x128xf32>
    tpu.vector_store %arg6[%c0_19, %c0_20], %40 {strides = array<i32>} : memref<16x128xf32, #tpu.memory_space<vmem>>, vector<16x128xf32>,
    %42 = arith.extui %0 : i1 to i32
    %c0_i32_21 = arith.constant 0 : i32
    %43 = arith.cmpi ne, %42, %c0_i32_21 : i32
    scf.if %43 {
      %44 = tpu.iota {dimensions = array<i32: 1>} : vector<16x128xi32>
      %c16_i32 = arith.constant 16 : i32
      %45 = vector.broadcast %c16_i32 : i32 to vector<16x128xi32>
      %46 = arith.cmpi slt, %44, %45 : vector<16x128xi32>
      %cst_22 = arith.constant 0xFF800000 : f32
      %47 = vector.broadcast %cst_22 : f32 to vector<16x128xf32>
      %48 = arith.select %46, %36, %47 : vector<16x128xi1>, vector<16x128xf32>
      %cst_23 = arith.constant dense<0xFF800000> : vector<16xf32>
      %49 = vector.multi_reduction <maximumf>, %48, %cst_23 [1] : vector<16x128xf32> to vector<16xf32>
      %50 = vector.shape_cast %49 : vector<16xf32> to vector<16x1xf32>
      %51 = vector.broadcast %50 : vector<16x1xf32> to vector<16x128xf32>
      %52 = arith.subf %48, %51 : vector<16x128xf32>
      %53 = math.exp %52 : vector<16x128xf32>
      %cst_24 = arith.constant dense<0.000000e+00> : vector<16xf32>
      %54 = vector.multi_reduction <add>, %53, %cst_24 [1] : vector<16x128xf32> to vector<16xf32>
      %55 = vector.shape_cast %54 : vector<16xf32> to vector<16x1xf32>
      %56 = math.log %55 : vector<16x1xf32>
      %57 = vector.broadcast %56 : vector<16x1xf32> to vector<16x128xf32>
      %58 = arith.subf %52, %57 : vector<16x128xf32>
      %cst_25 = arith.constant 0.000000e+00 : f32
      %59 = vector.broadcast %cst_25 : f32 to vector<16x128xf32>
      %60 = arith.select %46, %58, %59 : vector<16x128xi1>, vector<16x128xf32>
      %c0_26 = arith.constant 0 : index
      %c0_27 = arith.constant 0 : index
      %61 = vector.load %arg5[%c0_26, %c0_27] : memref<16x128xf32, #tpu.memory_space<vmem>>, vector<16x128xf32>
      tpu.vector_store %arg5[%c0_26, %c0_27], %60 {strides = array<i32>} : memref<16x128xf32, #tpu.memory_space<vmem>>, vector<16x128xf32>,
    } else {
    }
    return
  }
  func.func @transform_0(%arg0: i32) -> (i32, i32) {
    %c0_i32 = arith.constant 0 : i32
    %c0_i32_0 = arith.constant 0 : i32
    %c0_i32_1 = arith.constant 0 : i32
    return %c0_i32, %c0_i32_0 : i32, i32
  }
  func.func @transform_1(%arg0: i32) -> (i32, i32, i32) {
    %c0_i32 = arith.constant 0 : i32
    %c0_i32_0 = arith.constant 0 : i32
    %c0_i32_1 = arith.constant 0 : i32
    return %arg0, %c0_i32, %c0_i32_0 : i32, i32, i32
  }
  func.func @transform_2(%arg0: i32) -> (i32, i32, i32) {
    %c0_i32 = arith.constant 0 : i32
    %c0_i32_0 = arith.constant 0 : i32
    %c0_i32_1 = arith.constant 0 : i32
    return %arg0, %c0_i32, %c0_i32_0 : i32, i32, i32
  }
  func.func @transform_3(%arg0: i32) -> (i32, i32, i32) {
    %c0_i32 = arith.constant 0 : i32
    %c0_i32_0 = arith.constant 0 : i32
    %c0_i32_1 = arith.constant 0 : i32
    return %arg0, %c0_i32, %c0_i32_0 : i32, i32, i32
  }
  func.func @transform_4(%arg0: i32) -> (i32, i32) {
    %c0_i32 = arith.constant 0 : i32
    %c0_i32_0 = arith.constant 0 : i32
    %c0_i32_1 = arith.constant 0 : i32
    return %c0_i32, %c0_i32_0 : i32, i32
  }
}

</mosaic_0001>

<llo_original>
// kernel: dnn_forward.1
$region0: #{dnn_forward.1}
  #allocation0 [shape = 'u32[]', space=smem, size = 0x4, offset = 0x4, fixed_abs, tag = 'smem constant byte address 0x4 - core index']
  #allocation1 [shape = 'u32[144,128]{1,0:T(1,128)}', space=vmem, size = 0x12000, scoped, tag = 'internal scratch']
  #allocation2 [shape = 'f32[16,128]{1,0:T(8,128)}', space=vmem, size = 0x2000, scoped, tag = 'scratch operand']
  %s0 = inlined_call_operand.vmem [shape: f32[16,128], index: 0, kind: input, shape index: {}]
  %s1 = inlined_call_operand.hbm [shape: bf16[2,128,128], index: 1, kind: input, shape index: {}]
  %s2 = inlined_call_operand.vmem [shape: f32[2,1,128], index: 2, kind: input, shape index: {}]
  %s3 = inlined_call_operand.vmem [shape: f32[2,1,128], index: 3, kind: input, shape index: {}]
  %s4 = inlined_call_operand.vmem [shape: f32[16,128], index: 4, kind: output, shape index: {}]
  %s5 = sld [smem:[#allocation0]]
  $region61: #{dnn_forward.1} parent=0
    _
  %s7 = ssub.s32 1, %s5
  %s8 = scalar_select 0, %s7, %s5
  $region1: #{dnn_forward.1} parent=0
    #allocation3 [shape = 'u8[65536]{0}', space=vmem, size = 0x10000, scoped, tag = 'input window, operand 1']
    #allocation4 [shape = 's32[2]{0}', space=sflag, size = 0x8, scoped, tag = 'scoped memory for dnn_forward.1']
    %9 = vsyncpa [#allocation4], 0
    %s10 = scalar_lea.sflag [#allocation4], 1
    %11 = vsyncpa %s10, 0
    loop: start=0, step=1, limit=4
    $region2: #{dnn_forward.1} parent=1 // loop_pre_header
      _
    $region3: #{dnn_forward.1} parent=1 // loop_header
      %s13 = sphi 0, %s17
      %p14 = scmp.ge.s32.totalorder %s13, 4
      %s21 = sphi 0, %s21
      %s23 = sphi 0, %s21
      %s24 = sphi 0, %s23
      %s38 = sphi 0, %s24
      %s44 = sphi 0, %s46
      %s47 = sphi 0, %s44
      %s48 = sphi 0, %s47
      %s64 = sphi 0, %s48
      %s70 = sphi 0, %s72
      %s73 = sphi 0, %s70
      %s74 = sphi 0, %s73
      %s90 = sphi 0, %s74
      %s96 = sphi 0, %s98
      %s99 = sphi 0, %s96
      %s100 = sphi 0, %s99
      %s116 = sphi 0, %s100
      %s120 = sphi 0, %s120
      %s122 = sphi 0, %s120
      %s123 = sphi 0, %s122
      %s137 = sphi 0, %s123
    $region4: #{dnn_forward.1} parent=1 // loop_header_branch
      %16 = sbr.rel (%p14) target = $region8
    $region5: #{dnn_forward.1} parent=1 // loop_body
      %s18 = ssub.s32 %s13, 1
      %s19 = ssub.s32 %s13, 2
      %s20 = sadd.s32 %s13, 1
      %s22 = sadd.s32 %s21, 1
      %p25 = scmp.eq.s32.totalorder %s13, 1
      %p26 = scmp.ne.s32.totalorder %s21, %s23
      %p27 = scmp.eq.s32.totalorder %s13, 0
      %p28 = por %p26, %p27
      %p29 = scmp.ne.s32.totalorder %s21, %s23
      %p30 = scmp.eq.s32.totalorder %s18, 1
      %p31 = por %p29, %p30
      %p32 = scmp.ne.s32.totalorder %s23, %s24
      %p33 = scmp.eq.s32.totalorder %s18, 0
      %p34 = por %p32, %p33
      %p35 = scmp.ne.s32.totalorder %s23, %s24
      %p36 = scmp.eq.s32.totalorder %s19, 1
      %p37 = por %p35, %p36
      %p39 = scmp.ne.s32.totalorder %s24, %s38
      %p40 = scmp.eq.s32.totalorder %s19, 0
      %p41 = por %p39, %p40
      %s42 = ssub.s32 %s13, %s20
      %p43 = scmp.eq.s32.totalorder %s42, 0
      %s45 = sadd.s32 %s44, 1
      %s46 = scalar_select %p43, %s44, %s45
      %p49 = pneg %p43
      %p50 = scmp.eq.s32.totalorder %s13, 1
      %p51 = por %p49, %p50
      %p52 = scmp.ne.s32.totalorder %s44, %s47
      %p53 = scmp.eq.s32.totalorder %s13, 0
      %p54 = por %p52, %p53
      %p55 = scmp.ne.s32.totalorder %s44, %s47
      %p56 = scmp.eq.s32.totalorder %s18, 1
      %p57 = por %p55, %p56
      %p58 = scmp.ne.s32.totalorder %s47, %s48
      %p59 = scmp.eq.s32.totalorder %s18, 0
      %p60 = por %p58, %p59
      %p61 = scmp.ne.s32.totalorder %s47, %s48
      %p62 = scmp.eq.s32.totalorder %s19, 1
      %p63 = por %p61, %p62
      %p65 = scmp.ne.s32.totalorder %s48, %s64
      %p66 = scmp.eq.s32.totalorder %s19, 0
      %p67 = por %p65, %p66
      %s68 = ssub.s32 %s13, %s20
      %p69 = scmp.eq.s32.totalorder %s68, 0
      %s71 = sadd.s32 %s70, 1
      %s72 = scalar_select %p69, %s70, %s71
      %p75 = pneg %p69
      %p76 = scmp.eq.s32.totalorder %s13, 1
      %p77 = por %p75, %p76
      %p78 = scmp.ne.s32.totalorder %s70, %s73
      %p79 = scmp.eq.s32.totalorder %s13, 0
      %p80 = por %p78, %p79
      %p81 = scmp.ne.s32.totalorder %s70, %s73
      %p82 = scmp.eq.s32.totalorder %s18, 1
      %p83 = por %p81, %p82
      %p84 = scmp.ne.s32.totalorder %s73, %s74
      %p85 = scmp.eq.s32.totalorder %s18, 0
      %p86 = por %p84, %p85
      %p87 = scmp.ne.s32.totalorder %s73, %s74
      %p88 = scmp.eq.s32.totalorder %s19, 1
      %p89 = por %p87, %p88
      %p91 = scmp.ne.s32.totalorder %s74, %s90
      %p92 = scmp.eq.s32.totalorder %s19, 0
      %p93 = por %p91, %p92
      %s94 = ssub.s32 %s13, %s20
      %p95 = scmp.eq.s32.totalorder %s94, 0
      %s97 = sadd.s32 %s96, 1
      %s98 = scalar_select %p95, %s96, %s97
      %p101 = pneg %p95
      %p102 = scmp.eq.s32.totalorder %s13, 1
      %p103 = por %p101, %p102
      %p104 = scmp.ne.s32.totalorder %s96, %s99
      %p105 = scmp.eq.s32.totalorder %s13, 0
      %p106 = por %p104, %p105
      %p107 = scmp.ne.s32.totalorder %s96, %s99
      %p108 = scmp.eq.s32.totalorder %s18, 1
      %p109 = por %p107, %p108
      %p110 = scmp.ne.s32.totalorder %s99, %s100
      %p111 = scmp.eq.s32.totalorder %s18, 0
      %p112 = por %p110, %p111
      %p113 = scmp.ne.s32.totalorder %s99, %s100
      %p114 = scmp.eq.s32.totalorder %s19, 1
      %p115 = por %p113, %p114
      %p117 = scmp.ne.s32.totalorder %s100, %s116
      %p118 = scmp.eq.s32.totalorder %s19, 0
      %p119 = por %p117, %p118
      %s121 = sadd.s32 %s120, 1
      %p124 = scmp.eq.s32.totalorder %s13, 1
      %p125 = scmp.ne.s32.totalorder %s120, %s122
      %p126 = scmp.eq.s32.totalorder %s13, 0
      %p127 = por %p125, %p126
      %p128 = scmp.ne.s32.totalorder %s120, %s122
      %p129 = scmp.eq.s32.totalorder %s18, 1
      %p130 = por %p128, %p129
      %p131 = scmp.ne.s32.totalorder %s122, %s123
      %p132 = scmp.eq.s32.totalorder %s18, 0
      %p133 = por %p131, %p132
      %p134 = scmp.ne.s32.totalorder %s122, %s123
      %p135 = scmp.eq.s32.totalorder %s19, 1
      %p136 = por %p134, %p135
      %p138 = scmp.ne.s32.totalorder %s123, %s137
      %p139 = scmp.eq.s32.totalorder %s19, 0
      %p140 = por %p138, %p139
      %p141 = scmp.le.s32.totalorder 1, %s13
      %p142 = scmp.lt.s32.totalorder %s13, 3
      %p143 = pnand %p141, %p142
      %p144 = pneg %p143
      // Predicated region
      $region9: #{dnn_forward.1} parent=5 // pred_check
        _
      $region10: #{dnn_forward.1} parent=5 // pred_check_branch
        %146 = sbr.rel (%p143) target = $region12
      $region11: #{dnn_forward.1} parent=5 // pred_region
        %s147 = ssub.s32 %s13, 1
        // Predicated region
        $region13: #{dnn_forward.1} parent=11 // pred_check
          %p148 = pneg %p34
        $region14: #{dnn_forward.1} parent=11 // pred_check_branch
          %150 = sbr.rel (%p148) target = $region16
        $region15: #{dnn_forward.1} parent=11 // pred_region
          _
        $region16: #{dnn_forward.1} parent=11 // pred_fallthru
          _
      $region12: #{dnn_forward.1} parent=5 // pred_fallthru
        _
      %p151 = scmp.lt.s32.totalorder %s13, 2
      // Predicated region
      $region17: #{dnn_forward.1} parent=5 // pred_check
        %p152 = pneg %p151
      $region18: #{dnn_forward.1} parent=5 // pred_check_branch
        %154 = sbr.rel (%p152) target = $region20
      $region19: #{dnn_forward.1} parent=5 // pred_region
        // Predicated region
        $region21: #{dnn_forward.1} parent=19 // pred_check
          %p155 = pneg %p54
        $region22: #{dnn_forward.1} parent=19 // pred_check_branch
          %157 = sbr.rel (%p155) target = $region24
        $region23: #{dnn_forward.1} parent=19 // pred_region
          %s158 = sand.u32 %s44, 1
          %s159 = scalar_lea.sflag [#allocation4], %s158
          %s160 = sand.u32 %s44, 1
          %s161 = smul.addr %s160, 64
          %s162 = scalar_lea.vmem [#allocation3], %s161
          %s164 = ssub.s32 1024, 1024
          %165 = vsyncadd %s159, %s164
          %s166 = smul.addr %s13, 16
          %s167 = smul.addr %s166, 64
          %s168 = scalar_lea.hbm %s1, %s167
          %s169 = sshll.u32 %s162, 4
          %s170 = int_to_ptr.vmem [resolvable:$true] %s169
          %175 = dma.hbm_to_vmem [thread:$0]  %s168, 1024, %s170, %s159, 64, 64, 4
        $region24: #{dnn_forward.1} parent=19 // pred_fallthru
          _
        // Predicated region
        $region25: #{dnn_forward.1} parent=19 // pred_check
          %p176 = pneg %p80
        $region26: #{dnn_forward.1} parent=19 // pred_check_branch
          %178 = sbr.rel (%p176) target = $region28
        $region27: #{dnn_forward.1} parent=19 // pred_region
          %p179 = scmp.lt.s32.totalorder %s13, 1
          %s180 = scalar_select %p179, %s13, 1
          %s181 = scalar_lea.vmem %s2, %s180
        $region28: #{dnn_forward.1} parent=19 // pred_fallthru
          _
        // Predicated region
        $region29: #{dnn_forward.1} parent=19 // pred_check
          %p182 = pneg %p106
        $region30: #{dnn_forward.1} parent=19 // pred_check_branch
          %184 = sbr.rel (%p182) target = $region32
        $region31: #{dnn_forward.1} parent=19 // pred_region
          %p185 = scmp.lt.s32.totalorder %s13, 1
          %s186 = scalar_select %p185, %s13, 1
          %s187 = scalar_lea.vmem %s3, %s186
        $region32: #{dnn_forward.1} parent=19 // pred_fallthru
          _
      $region20: #{dnn_forward.1} parent=5 // pred_fallthru
        _
      %p188 = scmp.le.s32.totalorder 1, %s13
      %p189 = scmp.lt.s32.totalorder %s13, 3
      %p190 = pnand %p188, %p189
      %p191 = pneg %p190
      // Predicated region
      $region33: #{dnn_forward.1} parent=5 // pred_check
        _
      $region34: #{dnn_forward.1} parent=5 // pred_check_branch
        %193 = sbr.rel (%p190) target = $region36
      $region35: #{dnn_forward.1} parent=5 // pred_region
        %s194 = ssub.s32 %s13, 1
        %s195 = sand.u32 %s47, 1
        %s196 = scalar_lea.sflag [#allocation4], %s195
        %s197 = sand.u32 %s47, 1
        %s198 = smul.addr %s197, 64
        %s199 = scalar_lea.vmem [#allocation3], %s198
        // Predicated region
        $region37: #{dnn_forward.1} parent=35 // pred_check
          %p200 = pneg %p60
        $region38: #{dnn_forward.1} parent=35 // pred_check_branch
          %202 = sbr.rel (%p200) target = $region40
        $region39: #{dnn_forward.1} parent=35 // pred_region
          %203 = dma.done %s196, 1024
        $region40: #{dnn_forward.1} parent=35 // pred_fallthru
          _
        %p204 = pneg %p34
        %p205 = pneg %p31
        %s206 = sand.u32 %s47, 1
        %s207 = scalar_lea.sflag [#allocation4], %s206
        %s208 = sand.u32 %s47, 1
        %s209 = smul.addr %s208, 64
        %s210 = scalar_lea.vmem [#allocation3], %s209
        %p211 = pneg %p60
        %p212 = pneg %p57
        %p213 = scmp.lt.s32.totalorder %s18, 1
        %s214 = scalar_select %p213, %s18, 1
        %s215 = scalar_lea.vmem %s2, %s214
        %p216 = pneg %p86
        %p217 = pneg %p83
        %p218 = scmp.lt.s32.totalorder %s18, 1
        %s219 = scalar_select %p218, %s18, 1
        %s220 = scalar_lea.vmem %s3, %s219
        %p221 = pneg %p112
        %p222 = pneg %p109
        %p223 = pneg %p133
        %p224 = pneg %p130
        %p225 = scmp.lt.s32.totalorder %s18, 1
        %s226 = scalar_select %p225, %s18, 1
        %s227 = scalar_lea.vmem %s2, %s226
        %p228 = scmp.lt.s32.totalorder %s18, 1
        %s229 = scalar_select %p228, %s18, 1
        %s230 = scalar_lea.vmem %s3, %s229
        %p232 = scmp.eq.s32.totalorder %s18, 1
        %p233 = scmp.eq.s32.totalorder %s18, 0
        // Predicated region
        $region41: #{dnn_forward.1} parent=35 // pred_check
          %p234 = pneg %p233
        $region42: #{dnn_forward.1} parent=35 // pred_check_branch
          %236 = sbr.rel (%p234) target = $region44
        $region43: #{dnn_forward.1} parent=35 // pred_region
          %v237 = vld [vmem:[%s0] sm:$0xff]
          %v238 = vld [vmem:[%s0 + $0x8] sm:$0xff]
          %239 = vst [vmem:[#allocation2] sm:$0xff] %v237
          %240 = vst [vmem:[#allocation2 + $0x8] sm:$0xff] %v238
        $region44: #{dnn_forward.1} parent=35 // pred_fallthru
          _
        %v241 = vld [vmem:[#allocation2] sm:$0xff]
        %v242 = vld [vmem:[#allocation2 + $0x8] sm:$0xff]
        %v243 = vld [vmem:[%s199] sm:$0xf]
        %v244 = vld [vmem:[%s199 + $0x4] sm:$0xf]
        %v245 = vld [vmem:[%s199 + $0x8] sm:$0xf]
        %v246 = vld [vmem:[%s199 + $0xc] sm:$0xf]
        %v247 = vld [vmem:[%s199 + $0x10] sm:$0xf]
        %v248 = vld [vmem:[%s199 + $0x14] sm:$0xf]
        %v249 = vld [vmem:[%s199 + $0x18] sm:$0xf]
        %v250 = vld [vmem:[%s199 + $0x1c] sm:$0xf]
        %v251 = vld [vmem:[%s199 + $0x20] sm:$0xf]
        %v252 = vld [vmem:[%s199 + $0x24] sm:$0xf]
        %v253 = vld [vmem:[%s199 + $0x28] sm:$0xf]
        %v254 = vld [vmem:[%s199 + $0x2c] sm:$0xf]
        %v255 = vld [vmem:[%s199 + $0x30] sm:$0xf]
        %v256 = vld [vmem:[%s199 + $0x34] sm:$0xf]
        %v257 = vld [vmem:[%s199 + $0x38] sm:$0xf]
        %v258 = vld [vmem:[%s199 + $0x3c] sm:$0xf]
        %v259 = vpack.c.bf16 %v242, %v241
        %v276 = vunpack.c.l.b16 %v243
        %v277 = vunpack.c.l.b16 %v244
        %v278 = vunpack.c.l.b16 %v245
        %v279 = vunpack.c.l.b16 %v246
        %v280 = vunpack.c.l.b16 %v247
        %v281 = vunpack.c.l.b16 %v248
        %v282 = vunpack.c.l.b16 %v249
        %v283 = vunpack.c.l.b16 %v250
        %v284 = vunpack.c.l.b16 %v251
        %v285 = vunpack.c.l.b16 %v252
        %v286 = vunpack.c.l.b16 %v253
        %v287 = vunpack.c.l.b16 %v254
        %v288 = vunpack.c.l.b16 %v255
        %v289 = vunpack.c.l.b16 %v256
        %v290 = vunpack.c.l.b16 %v257
        %v291 = vunpack.c.l.b16 %v258
        %v292 = vpack.c.b16 %v277, %v276
        %v293 = vpack.c.b16 %v279, %v278
        %v294 = vpack.c.b16 %v281, %v280
        %v295 = vpack.c.b16 %v283, %v282
        %v296 = vpack.c.b16 %v285, %v284
        %v297 = vpack.c.b16 %v287, %v286
        %v298 = vpack.c.b16 %v289, %v288
        %v299 = vpack.c.b16 %v291, %v290
        %308 = vmatprep.subr.bf16.mxu0 0
        %309 = vmatpush1.bf16.msra.mxu0 %v292
        %310 = vmatprep.subr.bf16.mxu0 0
        %311 = vmatpush1.bf16.msra.mxu0 %v293
        %312 = vmatprep.subr.bf16.mxu0 0
        %313 = vmatpush1.bf16.msra.mxu0 %v294
        %314 = vmatprep.subr.bf16.mxu0 0
        %315 = vmatpush1.bf16.msra.mxu0 %v295
        %316 = vmatprep.subr.bf16.mxu0 0
        %317 = vmatpush1.bf16.msra.mxu0 %v296
        %318 = vmatprep.subr.bf16.mxu0 0
        %319 = vmatpush1.bf16.msra.mxu0 %v297
        %320 = vmatprep.subr.bf16.mxu0 0
        %321 = vmatpush1.bf16.msra.mxu0 %v298
        %322 = vmatprep.subr.bf16.mxu0 0
        %323 = vmatpush1.bf16.msra.mxu0 %v299
        %324 = vmatprep.subr.bf16.mxu0 0
        %325 = vmatpush1.bf16.msra.mxu0 0
        %326 = vmatprep.subr.bf16.mxu0 0
        %327 = vmatpush1.bf16.msra.mxu0 0
        %328 = vmatprep.subr.bf16.mxu0 0
        %329 = vmatpush1.bf16.msra.mxu0 0
        %330 = vmatprep.subr.bf16.mxu0 0
        %331 = vmatpush1.bf16.msra.mxu0 0
        %332 = vmatprep.subr.bf16.mxu0 0
        %333 = vmatpush1.bf16.msra.mxu0 0
        %334 = vmatprep.subr.bf16.mxu0 0
        %335 = vmatpush1.bf16.msra.mxu0 0
        %336 = vmatprep.subr.bf16.mxu0 0
        %337 = vmatpush1.bf16.msra.mxu0 0
        %338 = vmatprep.subr.bf16.mxu0 0
        %339 = vmatpush1.bf16.msra.mxu0 0
        %340 = vmatprep.mubr.bf16.mxu0 0
        %341 = vmatmul.mubr.bf16.gmra.mrb[0].mxu0 %v259
        %v342 = vpop.f32.mrb[0].mxu0
        %v343 = vadd.f32 0.0, %v342
        %v344 = vpop.f32.mrb[0].mxu0
        %v345 = vpop.f32.mrb[0].mxu0
        %v346 = vadd.f32 0.0, %v345
        %v347 = vpop.f32.mrb[0].mxu0
        %348 = vdwg.mxu0
        %v349 = vlaneseq
        %v350 = vshrl.u32 %v349, 7
        %v351 = vadd.s32 %v350, 8
        %vm352 = vcmp.lt.s32.totalorder %v350, 8
        %vm353 = vcmp.lt.s32.totalorder %v351, 8
        %v354 = vadd.f32 %v343, %v346
        %v355 = vrot.slane %v354, 4
        %v356 = vadd.f32 %v354, %v355
        %v357 = vrot.slane %v356, 2
        %v358 = vadd.f32 %v356, %v357
        %v359 = vrot.slane %v358, 1
        %v360 = vadd.f32 %v358, %v359
        %v361 = vmul.f32 %v360, 0.125
        %v362 = vsub.f32 %v343, %v361
        %v363 = vsub.f32 %v346, %v361
        %v364 = vsel %vm352, %v362, 0.0
        %v365 = vsel %vm353, %v363, 0.0
        %v366 = vmul.f32 %v364, %v364
        %v367 = vmul.f32 %v365, %v365
        %v368 = vadd.f32 %v366, %v367
        %v369 = vrot.slane %v368, 4
        %v370 = vadd.f32 %v368, %v369
        %v371 = vrot.slane %v370, 2
        %v372 = vadd.f32 %v370, %v371
        %v373 = vrot.slane %v372, 1
        %v374 = vadd.f32 %v372, %v373
        %v375 = vmul.f32 %v374, 0.125
        %v376 = vld [vmem:[%s227] sm:$0x1]
        %v377 = vadd.f32 %v375, 1e-05
        %v378 = vrsqrt.pop %v377
        %v379 = vmul.f32 %v376, %v378
        %v381 = vlaneseq
        %v382 = vshrl.u32 %v381, 7
        %v383 = vsub.s32 0, %v382
        %v384 = vrot.slane %v379, %v383
        %v386 = vmul.f32 %v362, %v384
        %v387 = vmul.f32 %v363, %v384
        %v388 = vld [vmem:[%s230] sm:$0x1]
        %v390 = vlaneseq
        %v391 = vshrl.u32 %v390, 7
        %v392 = vsub.s32 0, %v391
        %v393 = vrot.slane %v388, %v392
        %v395 = vadd.f32 %v386, %v393
        %v396 = vadd.f32 %v387, %v393
        %v397 = vmax.f32 %v395, 0.0
        %v398 = vmax.f32 %v396, 0.0
        %v399 = vsel %vm352, %v397, 0.0
        %v400 = vsel %vm353, %v398, 0.0
        %401 = vst [vmem:[#allocation2] sm:$0xff] %v399
        %402 = vst [vmem:[#allocation2 + $0x8] sm:$0xff] %v400
        // Predicated region
        $region45: #{dnn_forward.1} parent=35 // pred_check
          %p403 = pneg %p232
        $region46: #{dnn_forward.1} parent=35 // pred_check_branch
          %405 = sbr.rel (%p403) target = $region48
        $region47: #{dnn_forward.1} parent=35 // pred_region
          %v406 = vlaneseq
          %v407 = vand.u32 %v406, 127
          %vm408 = vcmp.lt.s32.totalorder %v407, 16
          %v409 = vsel %vm408, %v395, -inf
          %v410 = vsel %vm408, %v396, -inf
          %411 = vmax.xlane.f32.xlu0 %v409
          %v412 = vpop.xlane.xlu0 %411
          %413 = vmax.xlane.f32.xlu0 %v410
          %v414 = vpop.xlane.xlu0 %413
          %v415 = vsub.f32 %v409, %v412
          %v416 = vsub.f32 %v410, %v414
          %v417 = vmul.f32 %v415, 1.442695
          %v418 = vpow.pop %v417
          %v419 = vmul.f32 %v416, 1.442695
          %v420 = vpow.pop %v419
          %421 = vadd.xlane.f32.xlu0 %v418
          %v422 = vpop.xlane.xlu0 %421
          %423 = vadd.xlane.f32.xlu0 %v420
          %v424 = vpop.xlane.xlu0 %423
          %v425 = vlog2.pop %v422
          %v426 = vmul.f32 %v425, 0.6931472
          %v427 = vlog2.pop %v424
          %v428 = vmul.f32 %v427, 0.6931472
          %v429 = vsub.f32 %v415, %v426
          %v430 = vsub.f32 %v416, %v428
          %v431 = vsel %vm408, %v429, 0.0
          %v432 = vsel %vm408, %v430, 0.0
          %433 = vst [vmem:[%s4] sm:$0xff] %v431
          %434 = vst [vmem:[%s4 + $0x8] sm:$0xff] %v432
        $region48: #{dnn_forward.1} parent=35 // pred_fallthru
          _
        // Predicated region
        $region49: #{dnn_forward.1} parent=35 // pred_check
          %p435 = pneg %p130
        $region50: #{dnn_forward.1} parent=35 // pred_check_branch
          %437 = sbr.rel (%p435) target = $region52
        $region51: #{dnn_forward.1} parent=35 // pred_region
          _
        $region52: #{dnn_forward.1} parent=35 // pred_fallthru
          _
        // Predicated region
        $region53: #{dnn_forward.1} parent=35 // pred_check
          %p438 = pneg %p130
        $region54: #{dnn_forward.1} parent=35 // pred_check_branch
          %440 = sbr.rel (%p438) target = $region56
        $region55: #{dnn_forward.1} parent=35 // pred_region
          _
        $region56: #{dnn_forward.1} parent=35 // pred_fallthru
          _
      $region36: #{dnn_forward.1} parent=5 // pred_fallthru
        _
      %p441 = scmp.le.s32.totalorder 2, %s13
      // Predicated region
      $region57: #{dnn_forward.1} parent=5 // pred_check
        %p442 = pneg %p441
      $region58: #{dnn_forward.1} parent=5 // pred_check_branch
        %444 = sbr.rel (%p442) target = $region60
      $region59: #{dnn_forward.1} parent=5 // pred_region
        %s445 = ssub.s32 %s13, 2
      $region60: #{dnn_forward.1} parent=5 // pred_fallthru
        _
    $region6: #{dnn_forward.1} parent=1 // loop_footer
      %s17 = sadd.s32 1, %s13
    $region7: #{dnn_forward.1} parent=1 // loop_footer_branch
      %12 = sbr.rel target = $region3
    $region8: #{dnn_forward.1} parent=1 // loop_exit
      _
    %446 = vsyncpa [#allocation4], 1
    %s447 = scalar_lea.sflag [#allocation4], 1
    %448 = vsyncpa %s447, 1

</llo_original>
